<compile_context>
chip_gen: v7x
topology: tpu7x:2x2x1
jax: 0.10.0
libtpu: 0.0.40
codegen_flags: <defaults>
</compile_context>

<pallas_src>
import functools

import jax
import jax.numpy as jnp
from jax import lax
from jax.experimental import pallas as pl
from jax.experimental.pallas import tpu as pltpu

GAMMA = 1.5
ALPHA = 0.25
LANES = 128
ACC_ROWS = 8              # lane-dense (8,128) partial-sum accumulator block


def _round_up(x, m):
    return ((x + m - 1) // m) * m


def _tpu_kind():
    try:
        return jax.devices()[0].device_kind.lower()
    except Exception:
        return ""


def _focal_bce_f32(x, y, gamma, alpha, *, approx_recip=False):
    """Elementwise focal BCE-with-logits in f32 (shared by kernel & tail)."""
    # Reduced-EUP formulation: one exp, one log1p, one reciprocal, one sqrt
    # per element.
    e = jnp.exp(-jnp.abs(x))                                   # exp(-|x|)
    # BCEWithLogitsLoss(reduction='none'):
    #   loss = max(x, 0) - x*y + log(1 + exp(-|x|))
    bce = jnp.maximum(x, 0.0) - x * y + jnp.log1p(e)
    if approx_recip:
        inv = pl.reciprocal(1.0 + e, approx=True)              # EUP only
    else:
        inv = 1.0 / (1.0 + e)
    p = jnp.where(x >= 0.0, inv, e * inv)                      # == sigmoid(x)
    p_t = y * p + (1.0 - y) * (1.0 - p)
    alpha_factor = y * alpha + (1.0 - y) * (1.0 - alpha)
    t = 1.0 - p_t
    if gamma == 1.5:
        mod = t * jnp.sqrt(t)                                  # t**1.5
    elif gamma == 2.0:
        mod = t * t
    elif gamma == 1.0:
        mod = t
    else:
        mod = t ** gamma
    return bce * alpha_factor * mod


def _focal_bce_kernel(pred_ref, true_ref, acc_ref, *, gamma, alpha, rows,
                      tile_rows, blocks_per_split, needs_edge):
    c = pl.program_id(0)          # core-split ("parallel") axis
    i = pl.program_id(1)          # sequential reduction axis

    @pl.when(i == 0)
    def _():
        acc_ref[...] = jnp.zeros_like(acc_ref)

    x = pred_ref[...].astype(jnp.float32)
    y = true_ref[...].astype(jnp.float32)
    loss = _focal_bce_f32(x, y, gamma, alpha, approx_recip=True)

    def accumulate(val):
        # VPU-only partial reduction into the resident (8,128) accumulator;
        # the final cross-lane/sublane reduction happens in the wrapper.
        acc_ref[...] += val.reshape(
            tile_rows // ACC_ROWS, ACC_ROWS, LANES).sum(axis=0)

    if not needs_edge:
        # Hot path: no masking work at all.
        accumulate(loss)
    else:
        b = c * blocks_per_split + i          # unclamped logical block index
        in_bounds = (b + 1) * tile_rows <= rows

        @pl.when(in_bounds)
        def _():
            accumulate(loss)

        @pl.when(jnp.logical_not(in_bounds))
        def _():
            # Edge block (partially valid rows) or a dead trailing block of
            # the last core-split (fully masked).  Executes on <= 1 block per
            # core-split, so the iota / select cost is negligible.
            rid = lax.broadcasted_iota(jnp.int32, (tile_rows, LANES), 0)
            rid = rid + b * tile_rows
            accumulate(jnp.where(rid < rows, loss, 0.0))


def focal_loss(pred, true, *, gamma=GAMMA, alpha=ALPHA, reduction="mean"):
    """Focal loss over BCE-with-logits. pred/true: same shape (e.g. NCHW)."""
    assert pred.shape == true.shape
    if reduction not in ("mean", "sum"):
        # TODO(synk): elementwise reduction='none' path (per-element output).
        raise NotImplementedError("reduction must be 'mean' or 'sum'")

    total_n = pred.size
    rows = total_n // LANES
    rem = total_n - rows * LANES

    use_kernel = rows >= ACC_ROWS
    main_n = rows * LANES if use_kernel else 0

    if use_kernel:
        if rem == 0:
            # Free metadata reshape of the contiguous input -- no HBM copy.
            pred2 = pred.reshape(rows, LANES)
            true2 = true.reshape(rows, LANES)
        else:
            # TODO(synk): lane-unaligned inputs force one HBM copy per input
            # for the prefix slice; a manual-DMA (pl.ANY) path would remove it.
            pred2 = pred.reshape(-1)[:main_n].reshape(rows, LANES)
            true2 = true.reshape(-1)[:main_n].reshape(rows, LANES)

        kind = _tpu_kind()
        is_v7 = ("v7" in kind) or ("7x" in kind)
        # v5e/v6e: single TensorCore -> no core-split; v7x: 2 TCs.
        num_splits = 2 if is_v7 else 1
        num_splits = max(1, min(num_splits, rows // ACC_ROWS))
        # v5e/v6e: 128 MiB VMEM -> bigger tiles; v7x: 64 MiB -> keep 2048.
        max_tile_rows = 2048 if is_v7 else 4096

        tile_rows = min(max_tile_rows,
                        _round_up(pl.cdiv(rows, num_splits), ACC_ROWS))
        total_blocks = pl.cdiv(rows, tile_rows)
        blocks_per_split = pl.cdiv(total_blocks, num_splits)
        needs_edge = (rows % tile_rows != 0) or (total_blocks % num_splits != 0)

        if total_blocks % num_splits == 0:
            in_map = lambda c, i: (c * blocks_per_split + i, 0)
        else:
            # Clamp dead trailing block(s) to a valid block; their
            # contribution is zeroed by the in-kernel row mask.
            last = total_blocks - 1
            in_map = lambda c, i: (
                jnp.minimum(c * blocks_per_split + i, last), 0)

        kernel = functools.partial(
            _focal_bce_kernel,
            gamma=gamma, alpha=alpha, rows=rows, tile_rows=tile_rows,
            blocks_per_split=blocks_per_split, needs_edge=needs_edge)

        partials = pl.pallas_call(
            kernel,
            out_shape=jax.ShapeDtypeStruct(
                (num_splits, ACC_ROWS, LANES), jnp.float32),
            grid_spec=pltpu.PrefetchScalarGridSpec(
                num_scalar_prefetch=0,
                grid=(num_splits, blocks_per_split),
                in_specs=[
                    pl.BlockSpec((tile_rows, LANES), in_map),
                    pl.BlockSpec((tile_rows, LANES), in_map),
                ],
                out_specs=pl.BlockSpec((None, ACC_ROWS, LANES),
                                       lambda c, i: (c, 0, 0)),
            ),
            # NOTE: plain "parallel" shards the split axis across TCs; could
            # try pltpu.CORE_PARALLEL on v7x once verified on that generation.
            compiler_params=pltpu.CompilerParams(
                dimension_semantics=("parallel", "arbitrary"),
                vmem_limit_bytes=32 * 1024 * 1024,
            ),
            cost_estimate=pl.CostEstimate(
                flops=16 * main_n,
                transcendentals=4 * main_n,
                bytes_accessed=(
                    main_n * (pred.dtype.itemsize + true.dtype.itemsize)
                    + num_splits * ACC_ROWS * LANES * 4),
            ),
        )(pred2, true2)
        kernel_sum = jnp.sum(partials)
    else:
        kernel_sum = jnp.float32(0.0)

    if main_n < total_n:
        # Tiny tail (< 128 elems if the kernel ran, or the whole tiny input):
        # plain jnp, exact (full-precision reciprocal).
        tp = pred.reshape(-1)[main_n:].astype(jnp.float32)
        tt = true.reshape(-1)[main_n:].astype(jnp.float32)
        tail_sum = jnp.sum(_focal_bce_f32(tp, tt, gamma, alpha))
    else:
        tail_sum = jnp.float32(0.0)

    total = kernel_sum + tail_sum
    if reduction == "mean":
        return total / jnp.float32(total_n)
    return total


def focal_loss_ref(pred, true, *, gamma=GAMMA, alpha=ALPHA):
    x = pred.astype(jnp.float32)
    y = true.astype(jnp.float32)
    bce = jnp.maximum(x, 0.0) - x * y + jnp.log1p(jnp.exp(-jnp.abs(x)))
    p = jax.nn.sigmoid(x)
    p_t = y * p + (1 - y) * (1 - p)
    af = y * alpha + (1 - y) * (1 - alpha)
    mf = (1.0 - p_t) ** gamma
    return jnp.mean(bce * af * mf)


if __name__ == "__main__":
    key = jax.random.PRNGKey(0)
    k1, k2 = jax.random.split(key)
    B, C, H, W = 2, 4, 16, 16
    pred = jax.random.normal(k1, (B, C, H, W), dtype=jnp.float32)
    true = (jax.random.uniform(k2, (B, C, H, W)) > 0.5).astype(jnp.float32)

    out = focal_loss(pred, true, reduction="mean")
    out = jax.block_until_ready(out)

    ref = focal_loss_ref(pred, true)
    # rtol loosened slightly vs v1 because the kernel uses the EUP approx
    # reciprocal for sigmoid (per perf review).
    assert jnp.allclose(out, ref, rtol=1e-3, atol=1e-6), (out, ref)
    print("KERNEL_OK")
</pallas_src>

<mosaic_0001>
module attributes {stable_mosaic.version = 11 : i64} {
  func.func @_focal_bce_kernel(%arg0: i32, %arg1: i32, %arg2: memref<16x128xf32, #tpu.memory_space<vmem>>, %arg3: memref<16x128xf32, #tpu.memory_space<vmem>>, %arg4: memref<1x8x128xf32, #tpu.memory_space<vmem>>) attributes {dimension_semantics = [#tpu.dimension_semantics<parallel>, #tpu.dimension_semantics<arbitrary>], iteration_bounds = array<i64: 1, 1>, scalar_prefetch = 0 : i64, scratch_operands = 0 : i64, tpu.core_type = #tpu.core_type<tc>, window_params = [{transform_indices = @transform_0, window_bounds = array<i64: 16, 128>}, {transform_indices = @transform_1, window_bounds = array<i64: 16, 128>}, {transform_indices = @transform_2, window_bounds = array<i64: 1, 8, 128>}]} {
    %c0_i32 = arith.constant 0 : i32
    %0 = arith.cmpi eq, %arg1, %c0_i32 : i32
    %1 = arith.extui %0 : i1 to i32
    %c0_i32_0 = arith.constant 0 : i32
    %2 = arith.cmpi ne, %1, %c0_i32_0 : i32
    scf.if %2 {
      %cst_20 = arith.constant 0.000000e+00 : f32
      %50 = vector.broadcast %cst_20 : f32 to vector<8x128xf32>
      %c0_21 = arith.constant 0 : index
      %c0_22 = arith.constant 0 : index
      %c0_23 = arith.constant 0 : index
      %51 = vector.load %arg4[%c0_21, %c0_22, %c0_23] : memref<1x8x128xf32, #tpu.memory_space<vmem>>, vector<1x8x128xf32>
      %52 = vector.shape_cast %51 : vector<1x8x128xf32> to vector<8x128xf32>
      %53 = vector.shape_cast %50 : vector<8x128xf32> to vector<1x8x128xf32>
      tpu.vector_store %arg4[%c0_21, %c0_22, %c0_23], %53 {strides = array<i32>} : memref<1x8x128xf32, #tpu.memory_space<vmem>>, vector<1x8x128xf32>,
    } else {
    }
    %c0 = arith.constant 0 : index
    %c0_1 = arith.constant 0 : index
    %3 = vector.load %arg2[%c0, %c0_1] : memref<16x128xf32, #tpu.memory_space<vmem>>, vector<16x128xf32>
    %c0_2 = arith.constant 0 : index
    %c0_3 = arith.constant 0 : index
    %4 = vector.load %arg3[%c0_2, %c0_3] : memref<16x128xf32, #tpu.memory_space<vmem>>, vector<16x128xf32>
    %5 = math.absf %3 : vector<16x128xf32>
    %cst = arith.constant 0.000000e+00 : f32
    %6 = vector.broadcast %cst : f32 to vector<16x128xf32>
    %7 = arith.subf %6, %5 : vector<16x128xf32>
    %8 = math.exp %7 : vector<16x128xf32>
    %cst_4 = arith.constant 0.000000e+00 : f32
    %9 = vector.broadcast %cst_4 : f32 to vector<16x128xf32>
    %10 = arith.maximumf %3, %9 : vector<16x128xf32>
    %11 = arith.mulf %3, %4 : vector<16x128xf32>
    %12 = arith.subf %10, %11 : vector<16x128xf32>
    %13 = math.log1p %8 : vector<16x128xf32>
    %14 = arith.addf %12, %13 : vector<16x128xf32>
    %cst_5 = arith.constant 1.000000e+00 : f32
    %15 = vector.broadcast %cst_5 : f32 to vector<16x128xf32>
    %16 = arith.addf %15, %8 : vector<16x128xf32>
    %17 = tpu.reciprocal %16 {approx = true} : vector<16x128xf32> -> vector<16x128xf32>
    %cst_6 = arith.constant 0.000000e+00 : f32
    %18 = vector.broadcast %cst_6 : f32 to vector<16x128xf32>
    %19 = arith.cmpf oge, %3, %18 : vector<16x128xf32>
    %20 = arith.mulf %8, %17 : vector<16x128xf32>
    %21 = arith.select %19, %17, %20 : vector<16x128xi1>, vector<16x128xf32>
    %22 = arith.mulf %4, %21 : vector<16x128xf32>
    %cst_7 = arith.constant 1.000000e+00 : f32
    %23 = vector.broadcast %cst_7 : f32 to vector<16x128xf32>
    %24 = arith.subf %23, %4 : vector<16x128xf32>
    %cst_8 = arith.constant 1.000000e+00 : f32
    %25 = vector.broadcast %cst_8 : f32 to vector<16x128xf32>
    %26 = arith.subf %25, %21 : vector<16x128xf32>
    %27 = arith.mulf %24, %26 : vector<16x128xf32>
    %28 = arith.addf %22, %27 : vector<16x128xf32>
    %cst_9 = arith.constant 2.500000e-01 : f32
    %29 = vector.broadcast %cst_9 : f32 to vector<16x128xf32>
    %30 = arith.mulf %4, %29 : vector<16x128xf32>
    %cst_10 = arith.constant 1.000000e+00 : f32
    %31 = vector.broadcast %cst_10 : f32 to vector<16x128xf32>
    %32 = arith.subf %31, %4 : vector<16x128xf32>
    %cst_11 = arith.constant 7.500000e-01 : f32
    %33 = vector.broadcast %cst_11 : f32 to vector<16x128xf32>
    %34 = arith.mulf %32, %33 : vector<16x128xf32>
    %35 = arith.addf %30, %34 : vector<16x128xf32>
    %cst_12 = arith.constant 1.000000e+00 : f32
    %36 = vector.broadcast %cst_12 : f32 to vector<16x128xf32>
    %37 = arith.subf %36, %28 : vector<16x128xf32>
    %38 = math.sqrt %37 : vector<16x128xf32>
    %39 = arith.mulf %37, %38 : vector<16x128xf32>
    %40 = arith.mulf %14, %35 : vector<16x128xf32>
    %41 = arith.mulf %40, %39 : vector<16x128xf32>
    %c0_13 = arith.constant 0 : index
    %c0_14 = arith.constant 0 : index
    %c0_15 = arith.constant 0 : index
    %42 = vector.load %arg4[%c0_13, %c0_14, %c0_15] : memref<1x8x128xf32, #tpu.memory_space<vmem>>, vector<1x8x128xf32>
    %43 = vector.shape_cast %42 : vector<1x8x128xf32> to vector<8x128xf32>
    %44 = vector.shape_cast %41 : vector<16x128xf32> to vector<2x8x128xf32>
    %cst_16 = arith.constant dense<0.000000e+00> : vector<8x128xf32>
    %45 = vector.multi_reduction <add>, %44, %cst_16 [0] : vector<2x8x128xf32> to vector<8x128xf32>
    %46 = arith.addf %43, %45 : vector<8x128xf32>
    %c0_17 = arith.constant 0 : index
    %c0_18 = arith.constant 0 : index
    %c0_19 = arith.constant 0 : index
    %47 = vector.load %arg4[%c0_17, %c0_18, %c0_19] : memref<1x8x128xf32, #tpu.memory_space<vmem>>, vector<1x8x128xf32>
    %48 = vector.shape_cast %47 : vector<1x8x128xf32> to vector<8x128xf32>
    %49 = vector.shape_cast %46 : vector<8x128xf32> to vector<1x8x128xf32>
    tpu.vector_store %arg4[%c0_17, %c0_18, %c0_19], %49 {strides = array<i32>} : memref<1x8x128xf32, #tpu.memory_space<vmem>>, vector<1x8x128xf32>,
    return
  }
  func.func @transform_0(%arg0: i32, %arg1: i32) -> (i32, i32) {
    %c1_i32 = arith.constant 1 : i32
    %0 = arith.muli %arg0, %c1_i32 : i32
    %1 = arith.addi %0, %arg1 : i32
    %c0_i32 = arith.constant 0 : i32
    %c0_i32_0 = arith.constant 0 : i32
    return %1, %c0_i32 : i32, i32
  }
  func.func @transform_1(%arg0: i32, %arg1: i32) -> (i32, i32) {
    %c1_i32 = arith.constant 1 : i32
    %0 = arith.muli %arg0, %c1_i32 : i32
    %1 = arith.addi %0, %arg1 : i32
    %c0_i32 = arith.constant 0 : i32
    %c0_i32_0 = arith.constant 0 : i32
    return %1, %c0_i32 : i32, i32
  }
  func.func @transform_2(%arg0: i32, %arg1: i32) -> (i32, i32, i32) {
    %c0_i32 = arith.constant 0 : i32
    %c0_i32_0 = arith.constant 0 : i32
    %c0_i32_1 = arith.constant 0 : i32
    return %arg0, %c0_i32, %c0_i32_0 : i32, i32, i32
  }
}

</mosaic_0001>

<llo_original>
// kernel: tpu_custom_call.1
$region0: #{tpu_custom_call.1}
  #allocation0 [shape = 'u32[]', space=smem, size = 0x4, offset = 0x4, fixed_abs, tag = 'smem constant byte address 0x4 - core index']
  #allocation1 [shape = 'u32[144,128]{1,0:T(1,128)}', space=vmem, size = 0x12000, scoped, tag = 'internal scratch']
  %s0 = inlined_call_operand.hbm [shape: f32[16,128], index: 0, kind: input, shape index: {}]
  %s1 = inlined_call_operand.hbm [shape: f32[16,128], index: 1, kind: input, shape index: {}]
  %s2 = inlined_call_operand.hbm [shape: f32[1,8,128], index: 2, kind: output, shape index: {}]
  %s3 = sld [smem:[#allocation0]]
  $region30: #{tpu_custom_call.1} parent=0
    _
  %s5 = ssub.s32 1, %s3
  %s6 = scalar_select 0, %s5, %s3
  $region1: #{tpu_custom_call.1} parent=0
    #allocation2 [shape = 'u8[8192]{0}', space=vmem, size = 0x2000, scoped, tag = 'input window, operand 0, single buffered']
    #allocation3 [shape = 's32[1]{0}', space=sflag, size = 0x4, scoped, tag = 'scoped memory for tpu_custom_call.1']
    #allocation4 [shape = 's32[1]{0}', space=sflag, size = 0x4, scoped, tag = 'scoped memory for tpu_custom_call.1']
    #allocation5 [shape = 'u8[8192]{0}', space=vmem, size = 0x2000, scoped, tag = 'input window, operand 1, single buffered']
    #allocation6 [shape = 's32[1]{0}', space=sflag, size = 0x4, scoped, tag = 'scoped memory for tpu_custom_call.1']
    #allocation7 [shape = 'u8[4096]{0}', space=vmem, size = 0x1000, scoped, tag = 'output window, operand 0, single buffered']
    %7 = vsyncpa [#allocation3], 0
    %8 = vsyncpa [#allocation6], 0
    %9 = vsyncpa [#allocation4], 0
    // Predicated region
    $region2: #{tpu_custom_call.1} parent=1 // pred_check
      _
    $region3: #{tpu_custom_call.1} parent=1 // pred_check_branch
      %11 = sbr.rel (0) target = $region5
    $region4: #{tpu_custom_call.1} parent=1 // pred_region
      %s12 = sadd.s32 0, 0
      %s13 = smul.u32 2, %s12
      %s15 = ssub.s32 256, 256
      %16 = vsyncadd [#allocation3], %s15
      %s17 = smul.addr %s13, 128
      %s18 = scalar_lea.hbm %s0, %s17
      %s19 = sshll.u32 [#allocation2], 4
      %s20 = int_to_ptr.vmem [resolvable:$true] %s19
      %25 = dma.hbm_to_vmem [thread:$0]  %s18, 256, %s20, [#allocation3], 128, 128, 8
    $region5: #{tpu_custom_call.1} parent=1 // pred_fallthru
      _
    // Predicated region
    $region6: #{tpu_custom_call.1} parent=1 // pred_check
      _
    $region7: #{tpu_custom_call.1} parent=1 // pred_check_branch
      %27 = sbr.rel (0) target = $region9
    $region8: #{tpu_custom_call.1} parent=1 // pred_region
      %s28 = sadd.s32 0, 0
      %s29 = smul.u32 2, %s28
      %s31 = ssub.s32 256, 256
      %32 = vsyncadd [#allocation6], %s31
      %s33 = smul.addr %s29, 128
      %s34 = scalar_lea.hbm %s1, %s33
      %s35 = sshll.u32 [#allocation5], 4
      %s36 = int_to_ptr.vmem [resolvable:$true] %s35
      %41 = dma.hbm_to_vmem [thread:$0]  %s34, 256, %s36, [#allocation6], 128, 128, 8
    $region9: #{tpu_custom_call.1} parent=1 // pred_fallthru
      _
    // Predicated region
    $region10: #{tpu_custom_call.1} parent=1 // pred_check
      _
    $region11: #{tpu_custom_call.1} parent=1 // pred_check_branch
      %43 = sbr.rel (0) target = $region13
    $region12: #{tpu_custom_call.1} parent=1 // pred_region
      %44 = dma.done [#allocation3], 256
    $region13: #{tpu_custom_call.1} parent=1 // pred_fallthru
      _
    // Predicated region
    $region14: #{tpu_custom_call.1} parent=1 // pred_check
      _
    $region15: #{tpu_custom_call.1} parent=1 // pred_check_branch
      %46 = sbr.rel (0) target = $region17
    $region16: #{tpu_custom_call.1} parent=1 // pred_region
      %47 = dma.done [#allocation6], 256
    $region17: #{tpu_custom_call.1} parent=1 // pred_fallthru
      _
    %s48 = sadd.s32 0, 0
    %s49 = smul.u32 2, %s48
    %s50 = sadd.s32 0, 0
    %s51 = smul.u32 2, %s50
    %p52 = scmp.eq.s32.totalorder 0, 0
    // Predicated region
    $region18: #{tpu_custom_call.1} parent=1 // pred_check
      %p53 = pneg %p52
    $region19: #{tpu_custom_call.1} parent=1 // pred_check_branch
      %55 = sbr.rel (%p53) target = $region21
    $region20: #{tpu_custom_call.1} parent=1 // pred_region
      %56 = vst [vmem:[#allocation7] sm:$0xff] 0.0
    $region21: #{tpu_custom_call.1} parent=1 // pred_fallthru
      _
    %v57 = vld [vmem:[#allocation2] sm:$0xff]
    %v58 = vld [vmem:[#allocation2 + $0x8] sm:$0xff]
    %v59 = vld [vmem:[#allocation5] sm:$0xff]
    %v60 = vld [vmem:[#allocation5 + $0x8] sm:$0xff]
    %v61 = vand.u32 2147483647, %v57
    %v62 = vand.u32 2147483647, %v58
    %v63 = vsub.f32 0.0, %v61
    %v64 = vsub.f32 0.0, %v62
    %v65 = vmul.f32 %v63, 1.442695
    %v66 = vpow.pop %v65
    %v67 = vmul.f32 %v64, 1.442695
    %v68 = vpow.pop %v67
    %v69 = vmax.f32 %v57, 0.0
    %v70 = vmax.f32 %v58, 0.0
    %v71 = vmul.f32 %v57, %v59
    %v72 = vmul.f32 %v58, %v60
    %v73 = vsub.f32 %v69, %v71
    %v74 = vsub.f32 %v70, %v72
    %v75 = vadd.f32 %v66, 1.0
    %v76 = vlog2.pop %v75
    %v77 = vmul.f32 %v76, 0.6931472
    %v78 = vmul.f32 -0.5, %v66
    %v79 = vadd.f32 %v78, 1.0
    %v80 = vmul.f32 %v79, %v66
    %v81 = vand.u32 2147483647, %v66
    %vm82 = vcmp.lt.f32.partialorder %v81, 0.0004427343
    %v83 = vsel %vm82, %v80, %v77
    %v84 = vadd.f32 %v68, 1.0
    %v85 = vlog2.pop %v84
    %v86 = vmul.f32 %v85, 0.6931472
    %v87 = vmul.f32 -0.5, %v68
    %v88 = vadd.f32 %v87, 1.0
    %v89 = vmul.f32 %v88, %v68
    %v90 = vand.u32 2147483647, %v68
    %vm91 = vcmp.lt.f32.partialorder %v90, 0.0004427343
    %v92 = vsel %vm91, %v89, %v86
    %v93 = vadd.f32 %v73, %v83
    %v94 = vadd.f32 %v74, %v92
    %v95 = vadd.f32 %v66, 1.0
    %v96 = vadd.f32 %v68, 1.0
    %v97 = vrcp.pop %v95
    %v98 = vrcp.pop %v96
    %vm99 = vcmp.ge.f32.partialorder %v57, 0.0
    %vm100 = vcmp.ge.f32.partialorder %v58, 0.0
    %v101 = vmul.f32 %v66, %v97
    %v102 = vmul.f32 %v68, %v98
    %v103 = vsel %vm99, %v97, %v101
    %v104 = vsel %vm100, %v98, %v102
    %v105 = vmul.f32 %v59, %v103
    %v106 = vmul.f32 %v60, %v104
    %v107 = vsub.f32 1.0, %v59
    %v108 = vsub.f32 1.0, %v60
    %v109 = vsub.f32 1.0, %v103
    %v110 = vsub.f32 1.0, %v104
    %v111 = vmul.f32 %v107, %v109
    %v112 = vmul.f32 %v108, %v110
    %v113 = vadd.f32 %v105, %v111
    %v114 = vadd.f32 %v106, %v112
    %v115 = vmul.f32 %v59, 0.25
    %v116 = vmul.f32 %v60, 0.25
    %v117 = vmul.f32 %v107, 0.75
    %v118 = vmul.f32 %v108, 0.75
    %v119 = vadd.f32 %v115, %v117
    %v120 = vadd.f32 %v116, %v118
    %v121 = vsub.f32 1.0, %v113
    %v122 = vsub.f32 1.0, %v114
    %v123 = vrsqrt.pop %v121
    %v124 = vmul.f32 %v121, %v123
    %vm125 = vcmp.eq.f32.partialorder %v121, inf
    %v126 = vsel %vm125, %v121, %v124
    %vm127 = vcmp.eq.f32.partialorder %v121, 0.0
    %v128 = vand.u32 %v121, 2147483648
    %v129 = vsel %vm127, %v128, %v126
    %v130 = vrsqrt.pop %v122
    %v131 = vmul.f32 %v122, %v130
    %vm132 = vcmp.eq.f32.partialorder %v122, inf
    %v133 = vsel %vm132, %v122, %v131
    %vm134 = vcmp.eq.f32.partialorder %v122, 0.0
    %v135 = vand.u32 %v122, 2147483648
    %v136 = vsel %vm134, %v135, %v133
    %v137 = vmul.f32 %v121, %v129
    %v138 = vmul.f32 %v122, %v136
    %v139 = vmul.f32 %v93, %v119
    %v140 = vmul.f32 %v94, %v120
    %v141 = vmul.f32 %v139, %v137
    %v142 = vmul.f32 %v140, %v138
    %v143 = vld [vmem:[#allocation7] sm:$0xff]
    %v144 = vadd.f32 %v141, %v142
    %v145 = vadd.f32 %v143, %v144
    %146 = vst [vmem:[#allocation7] sm:$0xff] %v145
    // Predicated region
    $region22: #{tpu_custom_call.1} parent=1 // pred_check
      _
    $region23: #{tpu_custom_call.1} parent=1 // pred_check_branch
      %148 = sbr.rel (0) target = $region25
    $region24: #{tpu_custom_call.1} parent=1 // pred_region
      %s150 = ssub.s32 128, 128
      %151 = vsyncadd [#allocation4], %s150
      %s153 = sshll.u32 [#allocation7], 4
      %s154 = int_to_ptr.vmem [resolvable:$true] %s153
      %156 = dma.vmem_to_hbm [thread:$0]  %s154, 128, %s2, [#allocation4]
    $region25: #{tpu_custom_call.1} parent=1 // pred_fallthru
      _
    // Predicated region
    $region26: #{tpu_custom_call.1} parent=1 // pred_check
      _
    $region27: #{tpu_custom_call.1} parent=1 // pred_check_branch
      %158 = sbr.rel (0) target = $region29
    $region28: #{tpu_custom_call.1} parent=1 // pred_region
      %159 = dma.done [#allocation4], 128
    $region29: #{tpu_custom_call.1} parent=1 // pred_fallthru
      _
    %160 = vsyncpa [#allocation3], 1
    %161 = vsyncpa [#allocation6], 1
    %162 = vsyncpa [#allocation4], 1

</llo_original>
